<compile_context>
chip_gen: v5e
topology: v5e:2x2
jax: 0.10.0
libtpu: 0.0.40
codegen_flags: <defaults>
</compile_context>

<pallas_src>
import jax
import jax.numpy as jnp
from jax import lax
from jax.experimental import pallas as pl
from jax.experimental.pallas import tpu as pltpu


def _round_up(x, m):
    return ((x + m - 1) // m) * m


# Contract the last dim of both operands: A[m, k] @ B[n, k]^T -> [m, n]
_DN_TRANS_B = (((1,), (1,)), ((), ()))


# ---------------------------------------------------------------------------
# Kernel 1: router logits  (x @ gate_w^T)
# ---------------------------------------------------------------------------
def _gate_kernel(x_ref, gw_ref, o_ref):
    o_ref[...] = lax.dot_general(
        x_ref[...], gw_ref[...], _DN_TRANS_B,
        preferred_element_type=jnp.float32,
    ).astype(o_ref.dtype)


# ---------------------------------------------------------------------------
# Kernel 2: fused gated-MLP experts + routing-weighted accumulation
#   grid = (token_tiles, num_experts); expert axis is the reduction axis.
# ---------------------------------------------------------------------------
def _moe_kernel(rw_ref, x_ref, w1_ref, w3_ref, w2_ref, o_ref, acc_ref):
    e = pl.program_id(1)

    @pl.when(e == 0)
    def _():
        acc_ref[...] = jnp.zeros_like(acc_ref)

    x = x_ref[...]                                                   # [tt, H]
    h1 = lax.dot_general(x, w1_ref[...], _DN_TRANS_B,
                         preferred_element_type=jnp.float32)         # [tt, I]
    h3 = lax.dot_general(x, w3_ref[...], _DN_TRANS_B,
                         preferred_element_type=jnp.float32)         # [tt, I]
    g = (h1 * (1.0 / (1.0 + jnp.exp(-h1)))) * h3                     # SiLU(h1)*h3

    # Routing weight of this expert for every token in the tile: select
    # column e of the dense [tt, E] routing-weight block (0 if not selected).
    rw = rw_ref[...].astype(jnp.float32)                             # [tt, E]
    col = lax.broadcasted_iota(jnp.int32, rw.shape, 1)
    w_e = jnp.sum(jnp.where(col == e, rw, 0.0), axis=1, keepdims=True)  # [tt,1]

    # Scale before the (linear) down-projection — equivalent to scaling after.
    g = (g * w_e).astype(w2_ref.dtype)
    acc_ref[...] += lax.dot_general(g, w2_ref[...], _DN_TRANS_B,
                                    preferred_element_type=jnp.float32)  # [tt,H]

    @pl.when(e == pl.num_programs(1) - 1)
    def _():
        o_ref[...] = acc_ref[...].astype(o_ref.dtype)


# ---------------------------------------------------------------------------
# Wrapper
# ---------------------------------------------------------------------------
def mixtral_moe(hidden_states, gate_w, w1, w3, w2, top_k, *, tt_max=256):
    """hidden_states: [T, H]; gate_w: [E, H]; w1/w3: [E, I, H]; w2: [E, H, I]."""
    T, H = hidden_states.shape
    E, I, _ = w1.shape
    dtype = hidden_states.dtype

    tt = min(tt_max, _round_up(T, 8))
    T_pad = _round_up(T, tt)
    x = hidden_states
    if T_pad != T:
        x = jnp.pad(x, ((0, T_pad - T), (0, 0)))

    # ---- router logits (Pallas) ----
    logits = pl.pallas_call(
        _gate_kernel,
        out_shape=jax.ShapeDtypeStruct((T_pad, E), jnp.float32),
        grid_spec=pltpu.PrefetchScalarGridSpec(
            num_scalar_prefetch=0,
            grid=(T_pad // tt,),
            in_specs=[
                pl.BlockSpec((tt, H), lambda t: (t, 0)),
                pl.BlockSpec((E, H), lambda t: (0, 0)),
            ],
            out_specs=pl.BlockSpec((tt, E), lambda t: (t, 0)),
        ),
        compiler_params=pltpu.CompilerParams(
            dimension_semantics=("parallel",)),
    )(x, gate_w)

    # ---- routing: softmax -> top-k -> renormalize -> densify ----
    # TODO(synk): lax.top_k has no clean in-kernel Pallas TPU lowering; the
    # routing step stays in plain JAX and is handed to the expert kernel as a
    # dense [T, E] routing-weight matrix (zeros for unselected experts).
    probs = jax.nn.softmax(logits[:T].astype(jnp.float32), axis=-1)
    top_vals, top_idx = lax.top_k(probs, top_k)
    top_vals = top_vals / jnp.sum(top_vals, axis=-1, keepdims=True)
    dense_rw = jnp.zeros((T, E), jnp.float32)
    dense_rw = dense_rw.at[jnp.arange(T)[:, None], top_idx].set(top_vals)
    if T_pad != T:
        dense_rw = jnp.pad(dense_rw, ((0, T_pad - T), (0, 0)))

    # ---- fused expert MLPs + weighted accumulation (Pallas) ----
    out = pl.pallas_call(
        _moe_kernel,
        out_shape=jax.ShapeDtypeStruct((T_pad, H), dtype),
        grid_spec=pltpu.PrefetchScalarGridSpec(
            num_scalar_prefetch=0,
            grid=(T_pad // tt, E),
            in_specs=[
                pl.BlockSpec((tt, E), lambda t, e: (t, 0)),           # routing
                pl.BlockSpec((tt, H), lambda t, e: (t, 0)),           # tokens
                pl.BlockSpec((None, I, H), lambda t, e: (e, 0, 0)),   # w1[e]
                pl.BlockSpec((None, I, H), lambda t, e: (e, 0, 0)),   # w3[e]
                pl.BlockSpec((None, H, I), lambda t, e: (e, 0, 0)),   # w2[e]
            ],
            out_specs=pl.BlockSpec((tt, H), lambda t, e: (t, 0)),
            scratch_shapes=[pltpu.VMEM((tt, H), jnp.float32)],
        ),
        compiler_params=pltpu.CompilerParams(
            dimension_semantics=("parallel", "arbitrary")),
    )(dense_rw, x, w1, w3, w2)

    return out[:T]


# ---------------------------------------------------------------------------
# Pure-JAX reference (mirrors the PyTorch forward, non-ipex path)
# ---------------------------------------------------------------------------
def _reference(hidden_states, gate_w, w1, w3, w2, top_k):
    x = hidden_states.astype(jnp.float32)
    logits = x @ gate_w.T.astype(jnp.float32)
    probs = jax.nn.softmax(logits, axis=-1)
    top_vals, top_idx = lax.top_k(probs, top_k)
    top_vals = top_vals / jnp.sum(top_vals, axis=-1, keepdims=True)
    T, E = probs.shape
    dense = jnp.zeros((T, E), jnp.float32)
    dense = dense.at[jnp.arange(T)[:, None], top_idx].set(top_vals)
    out = jnp.zeros_like(x)
    for e in range(E):
        h1 = x @ w1[e].T
        h3 = x @ w3[e].T
        g = (h1 * jax.nn.sigmoid(h1)) * h3
        out = out + dense[:, e:e + 1] * (g @ w2[e].T)
    return out.astype(hidden_states.dtype)


if __name__ == "__main__":
    key = jax.random.PRNGKey(0)
    k_x, k_g, k_w1, k_w3, k_w2 = jax.random.split(key, 5)

    num_tokens = 16
    hidden_size = 128
    intermediate_size = 256
    num_experts = 4
    top_k = 2

    x = jax.random.normal(k_x, (num_tokens, hidden_size), dtype=jnp.float32) * 0.1
    # torch.rand-style uniform [0, 1) initialization, as in the module.
    gate_w = jax.random.uniform(k_g, (num_experts, hidden_size), dtype=jnp.float32)
    w1 = jax.random.uniform(
        k_w1, (num_experts, intermediate_size, hidden_size), dtype=jnp.float32)
    w3 = jax.random.uniform(
        k_w3, (num_experts, intermediate_size, hidden_size), dtype=jnp.float32)
    w2 = jax.random.uniform(
        k_w2, (num_experts, hidden_size, intermediate_size), dtype=jnp.float32)

    out = mixtral_moe(x, gate_w, w1, w3, w2, top_k)
    out = jax.block_until_ready(out)

    ref = _reference(x, gate_w, w1, w3, w2, top_k)
    assert out.shape == (num_tokens, hidden_size)
    assert jnp.allclose(out, ref, rtol=2e-2, atol=5e-2), float(
        jnp.max(jnp.abs(out - ref)))

    print("KERNEL_OK")
</pallas_src>

<mosaic_0001>
module attributes {stable_mosaic.version = 11 : i64} {
  func.func @_gate_kernel(%arg0: i32, %arg1: memref<16x128xf32, #tpu.memory_space<vmem>>, %arg2: memref<4x128xf32, #tpu.memory_space<vmem>>, %arg3: memref<16x4xf32, #tpu.memory_space<vmem>>) attributes {dimension_semantics = [#tpu.dimension_semantics<parallel>], iteration_bounds = array<i64: 1>, scalar_prefetch = 0 : i64, scratch_operands = 0 : i64, tpu.core_type = #tpu.core_type<tc>, window_params = [{transform_indices = @transform_0, window_bounds = array<i64: 16, 128>}, {pipeline_mode = #tpu.pipeline_mode<synchronous>, transform_indices = @transform_1, window_bounds = array<i64: 4, 128>}, {transform_indices = @transform_2, window_bounds = array<i64: 16, 4>}]} {
    %c0 = arith.constant 0 : index
    %c0_0 = arith.constant 0 : index
    %0 = vector.load %arg1[%c0, %c0_0] : memref<16x128xf32, #tpu.memory_space<vmem>>, vector<16x128xf32>
    %c0_1 = arith.constant 0 : index
    %c0_2 = arith.constant 0 : index
    %1 = vector.load %arg2[%c0_1, %c0_2] : memref<4x128xf32, #tpu.memory_space<vmem>>, vector<4x128xf32>
    %cst = arith.constant dense<0.000000e+00> : vector<16x4xf32>
    %2 = tpu.matmul %0, %1, %cst {dimension_numbers = #tpu.dot_dimension_numbers<[1], [1], [0], [0], [0, 0, 1, 0], [], []>} : vector<16x128xf32>, vector<4x128xf32>, vector<16x4xf32> -> vector<16x4xf32>
    %c0_3 = arith.constant 0 : index
    %c0_4 = arith.constant 0 : index
    %3 = vector.load %arg3[%c0_3, %c0_4] : memref<16x4xf32, #tpu.memory_space<vmem>>, vector<16x4xf32>
    tpu.vector_store %arg3[%c0_3, %c0_4], %2 {strides = array<i32>} : memref<16x4xf32, #tpu.memory_space<vmem>>, vector<16x4xf32>,
    return
  }
  func.func @transform_0(%arg0: i32) -> (i32, i32) {
    %c0_i32 = arith.constant 0 : i32
    %c0_i32_0 = arith.constant 0 : i32
    return %arg0, %c0_i32 : i32, i32
  }
  func.func @transform_1(%arg0: i32) -> (i32, i32) {
    %c0_i32 = arith.constant 0 : i32
    %c0_i32_0 = arith.constant 0 : i32
    %c0_i32_1 = arith.constant 0 : i32
    return %c0_i32, %c0_i32_0 : i32, i32
  }
  func.func @transform_2(%arg0: i32) -> (i32, i32) {
    %c0_i32 = arith.constant 0 : i32
    %c0_i32_0 = arith.constant 0 : i32
    return %arg0, %c0_i32 : i32, i32
  }
}

</mosaic_0001>

<llo_original>
// kernel: tpu_custom_call.1
$region0: #{tpu_custom_call.1}
  #allocation0 [shape = 'u32[]', space=smem, size = 0x4, offset = 0x4, fixed_abs, tag = 'smem constant byte address 0x4 - core index']
  #allocation1 [shape = 'u32[72,128]{1,0:T(1,128)}', space=vmem, size = 0x9000, scoped, tag = 'internal scratch']
  %s0 = inlined_call_operand.hbm [shape: f32[16,128], index: 0, kind: input, shape index: {}]
  %s1 = inlined_call_operand.hbm [shape: f32[4,128], index: 1, kind: input, shape index: {}]
  %s2 = inlined_call_operand.vmem [shape: f32[16,4], index: 2, kind: output, shape index: {}]
  %s3 = sld [smem:[#allocation0]]
  $region26: #{tpu_custom_call.1} parent=0
    _
  %s5 = ssub.s32 1, %s3
  %s6 = scalar_select 0, %s5, %s3
  $region1: #{tpu_custom_call.1} parent=0
    #allocation2 [shape = 'u8[8192]{0}', space=vmem, size = 0x2000, scoped, tag = 'input window, operand 0, single buffered']
    #allocation3 [shape = 's32[1]{0}', space=sflag, size = 0x4, scoped, tag = 'scoped memory for tpu_custom_call.1']
    #allocation4 [shape = 'u8[2048]{0}', space=vmem, size = 0x800, scoped, tag = 'input window, operand 1, single buffered']
    #allocation5 [shape = 's32[1]{0}', space=sflag, size = 0x4, scoped, tag = 'scoped memory for tpu_custom_call.1']
    %7 = vsyncpa [#allocation3], 0
    %8 = vsyncpa [#allocation5], 0
    // Predicated region
    $region2: #{tpu_custom_call.1} parent=1 // pred_check
      _
    $region3: #{tpu_custom_call.1} parent=1 // pred_check_branch
      %10 = sbr.rel (0) target = $region5
    $region4: #{tpu_custom_call.1} parent=1 // pred_region
      %12 = vsyncadd [#allocation3], 0
      %s13 = sshll.u32 %s0, 4
      %s14 = int_to_ptr.hbm [resolvable:$true] %s13
      %s15 = sshll.u32 [#allocation2], 4
      %s16 = int_to_ptr.vmem [resolvable:$true] %s15
      %21 = dma.hbm_to_vmem [thread:$0]  %s14, 256, %s16, [#allocation3], 128, 128, 8
    $region5: #{tpu_custom_call.1} parent=1 // pred_fallthru
      _
    // Predicated region
    $region6: #{tpu_custom_call.1} parent=1 // pred_check
      _
    $region7: #{tpu_custom_call.1} parent=1 // pred_check_branch
      %23 = sbr.rel (0) target = $region9
    $region8: #{tpu_custom_call.1} parent=1 // pred_region
      %25 = vsyncadd [#allocation5], 0
      %s27 = sshll.u32 %s1, 4
      %s28 = int_to_ptr.hbm [resolvable:$true] %s27
      %s29 = sshll.u32 [#allocation4], 4
      %s30 = int_to_ptr.vmem [resolvable:$true] %s29
      %32 = dma.hbm_to_vmem [thread:$0]  %s28, 64, %s30, [#allocation5]
    $region9: #{tpu_custom_call.1} parent=1 // pred_fallthru
      _
    // Predicated region
    $region10: #{tpu_custom_call.1} parent=1 // pred_check
      _
    $region11: #{tpu_custom_call.1} parent=1 // pred_check_branch
      %34 = sbr.rel (0) target = $region13
    $region12: #{tpu_custom_call.1} parent=1 // pred_region
      %36 = dma.done [#allocation3], 256
    $region13: #{tpu_custom_call.1} parent=1 // pred_fallthru
      _
    // Predicated region
    $region14: #{tpu_custom_call.1} parent=1 // pred_check
      _
    $region15: #{tpu_custom_call.1} parent=1 // pred_check_branch
      %38 = sbr.rel (0) target = $region17
    $region16: #{tpu_custom_call.1} parent=1 // pred_region
      %40 = dma.done [#allocation5], 64
    $region17: #{tpu_custom_call.1} parent=1 // pred_fallthru
      _
    %v41 = vld [vmem:[#allocation2] sm:$0xff]
    %v42 = vld [vmem:[#allocation2 + $0x8] sm:$0xff]
    %v43 = vld [vmem:[#allocation4] sm:$0xf]
    %44 = vmatpush.xpose.msra.mxu0 0.0
    %45 = vmatpush.xpose.msra.mxu0 0.0
    %46 = vmatpush.xpose.msra.mxu0 0.0
    %47 = vmatpush.xpose.msra.mxu0 0.0
    %48 = vmatpush.xpose.msra.mxu0 0.0
    %49 = vmatpush.xpose.msra.mxu0 0.0
    %50 = vmatpush.xpose.msra.mxu0 0.0
    %51 = vmatpush.xpose.msra.mxu0 0.0
    %52 = vmatpush.xpose.msra.mxu0 0.0
    %53 = vmatpush.xpose.msra.mxu0 0.0
    %54 = vmatpush.xpose.msra.mxu0 0.0
    %55 = vmatpush.xpose.msra.mxu0 0.0
    %56 = vmatpush.xpose.msra.mxu0 0.0
    %57 = vmatpush.xpose.msra.mxu0 0.0
    %58 = vmatpush.xpose.msra.mxu0 0.0
    %59 = vmatpush.xpose.msra.mxu0 %v43
    %60 = vmatmul.f32.gmra.mxu0 %v41
    %v61 = vpop.f32.mrf.mxu0
    %v62 = vadd.f32 0.0, %v61
    %63 = vmatmul.f32.gmra.mxu0 %v42
    %v64 = vpop.f32.mrf.mxu0
    %v65 = vadd.f32 0.0, %v64
    %66 = vdwg.mxu0
    %vm67 = vcmask 31744
    %68 = vst.msk [vmem:[%s2] sm:$0xff] %vm67, %v62
    %69 = vst.msk [vmem:[%s2 + $0x8] sm:$0xff] %vm67, %v65
    // Predicated region
    $region18: #{tpu_custom_call.1} parent=1 // pred_check
      _
    $region19: #{tpu_custom_call.1} parent=1 // pred_check_branch
      %71 = sbr.rel (0) target = $region21
    $region20: #{tpu_custom_call.1} parent=1 // pred_region
      _
    $region21: #{tpu_custom_call.1} parent=1 // pred_fallthru
      _
    // Predicated region
    $region22: #{tpu_custom_call.1} parent=1 // pred_check
      _
    $region23: #{tpu_custom_call.1} parent=1 // pred_check_branch
      %73 = sbr.rel (0) target = $region25
    $region24: #{tpu_custom_call.1} parent=1 // pred_region
      _
    $region25: #{tpu_custom_call.1} parent=1 // pred_fallthru
      _
    %74 = vsyncpa [#allocation3], 1
    %75 = vsyncpa [#allocation5], 1

</llo_original>
